<compile_context>
chip_gen: v6e
topology: v6e:2x2x1
jax: 0.10.0
libtpu: 0.0.40
codegen_flags: <defaults>
</compile_context>

<pallas_src>
import functools

import jax
import jax.numpy as jnp
from jax import lax
from jax.experimental import pallas as pl
from jax.experimental.pallas import tpu as pltpu

LANES = 128
SUBLANES = 8
CHUNK_ROWS = 512      # in-kernel accumulation chunk; multiple of 32 (int8 granule)
MAX_ROW_TILE = 8192   # 4 MiB per f32 input tile -> 16 MiB double-buffered

WEIGHTS = {"mse": 1.0, "l1": 0.5, "smooth_l1": 2.0}


def _round_up(x, m):
    return ((x + m - 1) // m) * m


def _is_v7x():
    try:
        kind = jax.devices()[0].device_kind.lower()
    except Exception:
        return False
    return ("v7" in kind) or ("7x" in kind)


def _combined_loss_kernel(p_ref, t_ref, o_ref, *, chunk, total_rows, needs_mask):
    """Per-block partial sums.

    p_ref, t_ref : (row_tile, 128) tiles in the inputs' native dtype.
    o_ref        : (1, 24, 128) f32 slab: rows [0:8]  = partial sum of d^2,
                   rows [8:16] = partial sum of |d|, rows [16:24] = smoothL1(d).
    """
    row_tile = p_ref.shape[0]
    n_chunks = row_tile // chunk
    block_row0 = pl.program_id(0) * row_tile

    if needs_mask:
        # Hoisted out of the loop: broadcast_in_dim is not CSE'd per-iteration.
        row_iota = lax.broadcasted_iota(jnp.int32, (chunk, LANES), 0)

    def body(c, carry):
        acc_sq, acc_ad, acc_sl = carry
        r0 = pl.multiple_of(c * chunk, chunk)
        p = p_ref[pl.ds(r0, chunk), :].astype(jnp.float32)
        t = t_ref[pl.ds(r0, chunk), :].astype(jnp.float32)
        if needs_mask:
            # Rows beyond the logical array (Pallas boundary-block padding,
            # undefined contents) are zeroed in BOTH inputs -> d == 0 -> they
            # contribute exactly 0 to every sum.
            valid = (row_iota + (block_row0 + r0)) < total_rows
            p = jnp.where(valid, p, 0.0)
            t = jnp.where(valid, t, 0.0)
        d = p - t
        ad = jnp.abs(d)
        sq = d * d
        # SmoothL1 (beta = 1.0): 0.5*d^2 if |d| < 1 else |d| - 0.5
        sl = jnp.where(ad < 1.0, 0.5 * sq, ad - 0.5)
        # (8,128)-tile-aligned reshape + axis-0 sum: pure vreg-wise VPU adds.
        acc_sq = acc_sq + sq.reshape(chunk // SUBLANES, SUBLANES, LANES).sum(axis=0)
        acc_ad = acc_ad + ad.reshape(chunk // SUBLANES, SUBLANES, LANES).sum(axis=0)
        acc_sl = acc_sl + sl.reshape(chunk // SUBLANES, SUBLANES, LANES).sum(axis=0)
        return acc_sq, acc_ad, acc_sl

    zero = jnp.zeros((SUBLANES, LANES), jnp.float32)
    acc_sq, acc_ad, acc_sl = lax.fori_loop(
        0, n_chunks, body, (zero, zero, zero), unroll=True)

    # Single contiguous, lane-dense (24, 128) store per block.
    o_ref[0] = jnp.concatenate([acc_sq, acc_ad, acc_sl], axis=0)


@jax.jit
def combined_loss(predictions, targets):
    """Pallas equivalent of CombinedLoss.forward for the config above.

    Returns (total_loss, {"mse": ..., "l1": ..., "smooth_l1": ...}) as f32
    scalars (the dict mirrors the PyTorch loss_details of unweighted values).
    """
    n_elem = predictions.size
    itemsize = jnp.dtype(predictions.dtype).itemsize
    # Sublane granule: 8 rows for 4-byte, 16 for 2-byte, 32 for 1-byte dtypes.
    granule = SUBLANES * max(1, 4 // itemsize)

    flat_p = predictions.reshape(-1)
    flat_t = targets.reshape(-1)

    lane_pad = (-n_elem) % LANES
    if lane_pad:
        # TODO(synk): this pad materializes a copy of both inputs in HBM; it is
        # only taken when n_elem is not a multiple of 128 (rare for NN tensors).
        flat_p = jnp.pad(flat_p, (0, lane_pad))
        flat_t = jnp.pad(flat_t, (0, lane_pad))
    rows = (n_elem + lane_pad) // LANES

    if rows <= CHUNK_ROWS:
        row_tile = _round_up(rows, granule)
    else:
        row_tile = min(MAX_ROW_TILE, _round_up(rows, CHUNK_ROWS))
    chunk = min(CHUNK_ROWS, row_tile)          # always divides row_tile
    num_blocks = -(-rows // row_tile)          # cdiv
    needs_mask = (rows % row_tile) != 0        # only compile masking if needed

    # Metadata-only reshape (no HBM copy) in the common n_elem % 128 == 0 case.
    p2d = flat_p.reshape(rows, LANES)
    t2d = flat_t.reshape(rows, LANES)

    # Raise the scoped-VMEM limit only when the double-buffered tiles need it
    # (v5e defaults to 16 MiB); 48 MiB stays under v7x's 64 MiB physical VMEM.
    tile_bytes = 2 * 2 * row_tile * LANES * itemsize
    vmem_limit = 48 * 1024 * 1024 if tile_bytes > 12 * 1024 * 1024 else None

    # No carried accumulator across the grid -> axis is fully parallel; on v7x
    # explicitly split the stream across both TensorCores.
    if _is_v7x() and num_blocks > 1:
        dim_sem = (pltpu.CORE_PARALLEL,)
    else:
        dim_sem = ("parallel",)

    kernel = functools.partial(
        _combined_loss_kernel, chunk=chunk, total_rows=rows, needs_mask=needs_mask)

    partials = pl.pallas_call(
        kernel,
        out_shape=jax.ShapeDtypeStruct(
            (num_blocks, 3 * SUBLANES, LANES), jnp.float32),
        grid=(num_blocks,),
        in_specs=[
            pl.BlockSpec((row_tile, LANES), lambda i: (i, 0)),
            pl.BlockSpec((row_tile, LANES), lambda i: (i, 0)),
        ],
        out_specs=pl.BlockSpec((1, 3 * SUBLANES, LANES), lambda i: (i, 0, 0)),
        compiler_params=pltpu.CompilerParams(
            dimension_semantics=dim_sem,
            vmem_limit_bytes=vmem_limit,
        ),
    )(p2d, t2d)

    # Tiny (num_blocks * 24 * 128)-element reduction + scalar glue in plain JAX.
    sums = partials.reshape(num_blocks, 3, SUBLANES, LANES).sum(axis=(0, 2, 3))
    inv_n = 1.0 / float(n_elem)
    mse = sums[0] * inv_n
    l1 = sums[1] * inv_n
    smooth_l1 = sums[2] * inv_n

    total = (WEIGHTS["mse"] * mse
             + WEIGHTS["l1"] * l1
             + WEIGHTS["smooth_l1"] * smooth_l1)
    return total, {"mse": mse, "l1": l1, "smooth_l1": smooth_l1}


if __name__ == "__main__":
    key = jax.random.PRNGKey(0)
    kp, kt = jax.random.split(key)
    # NCHW like the PyTorch side: batch=2, channels=4, spatial=16x16
    predictions = jax.random.normal(kp, (2, 4, 16, 16), dtype=jnp.float32)
    targets = jax.random.normal(kt, (2, 4, 16, 16), dtype=jnp.float32)

    total, details = combined_loss(predictions, targets)
    jax.block_until_ready(total)

    # Pure-JAX reference check of the combined-loss semantics.
    d = predictions - targets
    ad = jnp.abs(d)
    ref_mse = jnp.mean(d * d)
    ref_l1 = jnp.mean(ad)
    ref_sl1 = jnp.mean(jnp.where(ad < 1.0, 0.5 * d * d, ad - 0.5))
    ref_total = 1.0 * ref_mse + 0.5 * ref_l1 + 2.0 * ref_sl1

    assert jnp.allclose(details["mse"], ref_mse, rtol=1e-5, atol=1e-5)
    assert jnp.allclose(details["l1"], ref_l1, rtol=1e-5, atol=1e-5)
    assert jnp.allclose(details["smooth_l1"], ref_sl1, rtol=1e-5, atol=1e-5)
    assert jnp.allclose(total, ref_total, rtol=1e-5, atol=1e-5)

    print("KERNEL_OK")
</pallas_src>

<mosaic_0001>
module attributes {stable_mosaic.version = 11 : i64} {
  func.func @_combined_loss_kernel(%arg0: i32, %arg1: memref<16x128xf32, #tpu.memory_space<vmem>>, %arg2: memref<16x128xf32, #tpu.memory_space<vmem>>, %arg3: memref<1x24x128xf32, #tpu.memory_space<vmem>>) attributes {dimension_semantics = [#tpu.dimension_semantics<parallel>], iteration_bounds = array<i64: 1>, scalar_prefetch = 0 : i64, scratch_operands = 0 : i64, tpu.core_type = #tpu.core_type<tc>, window_params = [{transform_indices = @transform_0, window_bounds = array<i64: 16, 128>}, {transform_indices = @transform_1, window_bounds = array<i64: 16, 128>}, {transform_indices = @transform_2, window_bounds = array<i64: 1, 24, 128>}]} {
    %cst = arith.constant 0.000000e+00 : f32
    %0 = vector.broadcast %cst : f32 to vector<8x128xf32>
    %c0_i32 = arith.constant 0 : i32
    %c16_i32 = arith.constant 16 : i32
    %1 = arith.muli %c0_i32, %c16_i32 : i32
    %2 = tpu.assume_multiple %1, 16 : i32
    %3 = arith.index_cast %2 : i32 to index
    %c0 = arith.constant 0 : index
    %4 = vector.load %arg1[%3, %c0] : memref<16x128xf32, #tpu.memory_space<vmem>>, vector<16x128xf32>
    %5 = arith.index_cast %2 : i32 to index
    %c0_0 = arith.constant 0 : index
    %6 = vector.load %arg2[%5, %c0_0] : memref<16x128xf32, #tpu.memory_space<vmem>>, vector<16x128xf32>
    %7 = arith.subf %4, %6 : vector<16x128xf32>
    %8 = math.absf %7 : vector<16x128xf32>
    %9 = arith.mulf %7, %7 : vector<16x128xf32>
    %cst_1 = arith.constant 1.000000e+00 : f32
    %10 = vector.broadcast %cst_1 : f32 to vector<16x128xf32>
    %11 = arith.cmpf olt, %8, %10 : vector<16x128xf32>
    %cst_2 = arith.constant 5.000000e-01 : f32
    %12 = vector.broadcast %cst_2 : f32 to vector<16x128xf32>
    %13 = arith.mulf %12, %9 : vector<16x128xf32>
    %cst_3 = arith.constant 5.000000e-01 : f32
    %14 = vector.broadcast %cst_3 : f32 to vector<16x128xf32>
    %15 = arith.subf %8, %14 : vector<16x128xf32>
    %16 = arith.select %11, %13, %15 : vector<16x128xi1>, vector<16x128xf32>
    %17 = vector.shape_cast %9 : vector<16x128xf32> to vector<2x8x128xf32>
    %cst_4 = arith.constant dense<0.000000e+00> : vector<8x128xf32>
    %18 = vector.multi_reduction <add>, %17, %cst_4 [0] : vector<2x8x128xf32> to vector<8x128xf32>
    %19 = arith.addf %0, %18 : vector<8x128xf32>
    %20 = vector.shape_cast %8 : vector<16x128xf32> to vector<2x8x128xf32>
    %cst_5 = arith.constant dense<0.000000e+00> : vector<8x128xf32>
    %21 = vector.multi_reduction <add>, %20, %cst_5 [0] : vector<2x8x128xf32> to vector<8x128xf32>
    %22 = arith.addf %0, %21 : vector<8x128xf32>
    %23 = vector.shape_cast %16 : vector<16x128xf32> to vector<2x8x128xf32>
    %cst_6 = arith.constant dense<0.000000e+00> : vector<8x128xf32>
    %24 = vector.multi_reduction <add>, %23, %cst_6 [0] : vector<2x8x128xf32> to vector<8x128xf32>
    %25 = arith.addf %0, %24 : vector<8x128xf32>
    %c1_i32 = arith.constant 1 : i32
    %26 = tpu.concatenate %19, %22, %25 in 0 : vector<8x128xf32>, vector<8x128xf32>, vector<8x128xf32> -> vector<24x128xf32>
    %c0_7 = arith.constant 0 : index
    %c0_8 = arith.constant 0 : index
    %c0_9 = arith.constant 0 : index
    %27 = vector.load %arg3[%c0_7, %c0_8, %c0_9] : memref<1x24x128xf32, #tpu.memory_space<vmem>>, vector<1x24x128xf32>
    %28 = vector.shape_cast %27 : vector<1x24x128xf32> to vector<24x128xf32>
    %29 = vector.shape_cast %26 : vector<24x128xf32> to vector<1x24x128xf32>
    tpu.vector_store %arg3[%c0_7, %c0_8, %c0_9], %29 {strides = array<i32>} : memref<1x24x128xf32, #tpu.memory_space<vmem>>, vector<1x24x128xf32>,
    return
  }
  func.func @transform_0(%arg0: i32) -> (i32, i32) {
    %c0_i32 = arith.constant 0 : i32
    %c0_i32_0 = arith.constant 0 : i32
    return %arg0, %c0_i32 : i32, i32
  }
  func.func @transform_1(%arg0: i32) -> (i32, i32) {
    %c0_i32 = arith.constant 0 : i32
    %c0_i32_0 = arith.constant 0 : i32
    return %arg0, %c0_i32 : i32, i32
  }
  func.func @transform_2(%arg0: i32) -> (i32, i32, i32) {
    %c0_i32 = arith.constant 0 : i32
    %c0_i32_0 = arith.constant 0 : i32
    %c0_i32_1 = arith.constant 0 : i32
    return %arg0, %c0_i32, %c0_i32_0 : i32, i32, i32
  }
}

</mosaic_0001>

<llo_original>
// kernel: combined_loss.1
$region0: #{combined_loss.1}
  #allocation0 [shape = 'u32[]', space=smem, size = 0x4, offset = 0x4, fixed_abs, tag = 'smem constant byte address 0x4 - core index']
  #allocation1 [shape = 'u32[144,128]{1,0:T(1,128)}', space=vmem, size = 0x12000, scoped, tag = 'internal scratch']
  %s0 = inlined_call_operand.vmem [shape: f32[16,128], index: 0, kind: input, shape index: {}]
  %s1 = inlined_call_operand.vmem [shape: f32[16,128], index: 1, kind: input, shape index: {}]
  %s2 = inlined_call_operand.vmem [shape: f32[1,24,128], index: 2, kind: output, shape index: {}]
  %s3 = sld [smem:[#allocation0]]
  $region18: #{combined_loss.1} parent=0
    _
  %s5 = ssub.s32 1, %s3
  %s6 = scalar_select 0, %s5, %s3
  // Predicated region
  $region2: #{combined_loss.1} parent=0 // pred_check
    _
  $region3: #{combined_loss.1} parent=0 // pred_check_branch
    %8 = sbr.rel (0) target = $region5
  $region4: #{combined_loss.1} parent=0 // pred_region
    _
  $region5: #{combined_loss.1} parent=0 // pred_fallthru
    _
  // Predicated region
  $region6: #{combined_loss.1} parent=0 // pred_check
    _
  $region7: #{combined_loss.1} parent=0 // pred_check_branch
    %10 = sbr.rel (0) target = $region9
  $region8: #{combined_loss.1} parent=0 // pred_region
    _
  $region9: #{combined_loss.1} parent=0 // pred_fallthru
    _
  %v11 = vld [vmem:[%s0] sm:$0xff]
  %v12 = vld [vmem:[%s0 + $0x8] sm:$0xff]
  %v13 = vld [vmem:[%s1] sm:$0xff]
  %v14 = vld [vmem:[%s1 + $0x8] sm:$0xff]
  %v15 = vsub.f32 %v11, %v13
  %v16 = vsub.f32 %v12, %v14
  %v17 = vand.u32 2147483647, %v15
  %v18 = vand.u32 2147483647, %v16
  %v19 = vmul.f32 %v15, %v15
  %v20 = vmul.f32 %v16, %v16
  %vm21 = vcmp.lt.f32.partialorder %v17, 1.0
  %vm22 = vcmp.lt.f32.partialorder %v18, 1.0
  %v23 = vmul.f32 %v19, 0.5
  %v24 = vmul.f32 %v20, 0.5
  %v25 = vsub.f32 %v17, 0.5
  %v26 = vsub.f32 %v18, 0.5
  %v27 = vsel %vm21, %v23, %v25
  %v28 = vsel %vm22, %v24, %v26
  %v29 = vadd.f32 %v19, %v20
  %v30 = vadd.f32 %v29, 0.0
  %v31 = vadd.f32 %v17, %v18
  %v32 = vadd.f32 %v31, 0.0
  %v33 = vadd.f32 %v27, %v28
  %v34 = vadd.f32 %v33, 0.0
  %35 = vst [vmem:[%s2] sm:$0xff] %v30
  %36 = vst [vmem:[%s2 + $0x8] sm:$0xff] %v32
  %37 = vst [vmem:[%s2 + $0x10] sm:$0xff] %v34
  // Predicated region
  $region10: #{combined_loss.1} parent=0 // pred_check
    _
  $region11: #{combined_loss.1} parent=0 // pred_check_branch
    %39 = sbr.rel (0) target = $region13
  $region12: #{combined_loss.1} parent=0 // pred_region
    _
  $region13: #{combined_loss.1} parent=0 // pred_fallthru
    _
  // Predicated region
  $region14: #{combined_loss.1} parent=0 // pred_check
    _
  $region15: #{combined_loss.1} parent=0 // pred_check_branch
    %41 = sbr.rel (0) target = $region17
  $region16: #{combined_loss.1} parent=0 // pred_region
    _
  $region17: #{combined_loss.1} parent=0 // pred_fallthru
    _

</llo_original>
